<compile_context>
chip_gen: v5e
topology: v5e:2x2
jax: 0.10.0
libtpu: 0.0.40
codegen_flags: <defaults>
</compile_context>

<pallas_src>
import functools
import jax
import jax.numpy as jnp
from jax.experimental import pallas as pl
from jax.experimental.pallas import tpu as pltpu

# ---------------- model sizes (small, synthetic) ----------------
B = 2            # batch per domain
S = 8            # sequence length
H = 32           # "bert" hidden size
F = 32           # feature extractor output size
C = 4            # task classes
D = 2            # domain classes
V = 50           # vocab size
VP = 64          # vocab padded to a sublane multiple for the one-hot matmul
NUM_SRC_DOMAINS = 2
LANE = 128       # lane-dense output slab width (task cols [0,C), domain [C,C+D))
NARROW = 8       # narrow lane slice holding all C+D live classifier columns

_VMEM_SPEC = pl.BlockSpec(memory_space=pltpu.MemorySpace.VMEM)


def _round_up(n, m):
    return (n + m - 1) // m * m


# ---------------- fused Pallas kernel ----------------
def _mdan_fused_kernel(ids_ref, pool_ref, table_ref, w_enc_ref, b_enc_ref,
                       w_fe_ref, b_fe_ref, w_cls_ref, b_cls_ref, out_ref,
                       *, seq_len, num_task, num_dom):
    """Fused embedding + encoder + pooling + feature extractor + classifiers.

    ids_ref   : [NT, 1]   int32 flattened token ids (NT = NB_pad * S)
    pool_ref  : [NB, S]   f32 per-row mask/len pooling weights
    table_ref : [VP, H]   bf16 embedding table (zero-padded vocab)
    w_cls     : [F, 128]  bf16 concat(w_tc, w_dc) zero-padded to 128 lanes
    out_ref   : [NB, 128] cols [0,C) task log-probs, [C,C+D) domain log-probs
    """
    nt = ids_ref.shape[0]
    vp, h = table_ref.shape
    nb = pool_ref.shape[0]

    # 1) embedding lookup fused as a one-hot matmul (table is tiny).   [NT, H]
    one_hot = (jax.lax.broadcasted_iota(jnp.int32, (nt, vp), 1)
               == ids_ref[...]).astype(jnp.bfloat16)
    emb = jnp.dot(one_hot, table_ref[...], preferred_element_type=jnp.float32)

    # 2) per-token "bert" encoder: tanh(emb @ W_enc + b_enc)           [NT, H]
    #    bf16 operands at the matmul boundary, f32 accumulation (MXU-native).
    hidden = jnp.tanh(
        jnp.dot(emb.astype(jnp.bfloat16), w_enc_ref[...],
                preferred_element_type=jnp.float32) + b_enc_ref[...])

    # 3) attention-mask mean pooling: per-row weights + sublane reduce [NB, H]
    #    (mask and 1/denominator were folded into pool_ref in the wrapper, so
    #     no divide and no quadratic [NB, NB*S] matrix.)
    hidden3 = hidden.reshape(nb, seq_len, h)
    pooled = jnp.sum(pool_ref[...][:, :, None] * hidden3, axis=1)

    # 4) feature extractor: ReLU(pooled @ W_fe + b_fe)                 [NB, F]
    feat = jnp.maximum(
        jnp.dot(pooled.astype(jnp.bfloat16), w_fe_ref[...],
                preferred_element_type=jnp.float32) + b_fe_ref[...],
        0.0)

    # 5) fused task + domain classifier: ONE lane-dense matmul         [NB, 128]
    logits = jnp.dot(feat.astype(jnp.bfloat16), w_cls_ref[...],
                     preferred_element_type=jnp.float32) + b_cls_ref[...]

    # 6) two numerically-stable log_softmaxes; reductions on a narrow 8-lane
    #    slice (all live columns), result written into the 128-wide slab with
    #    a single unmasked store.
    narrow = logits[:, :NARROW]                                   # [NB, 8]
    col8 = jax.lax.broadcasted_iota(jnp.int32, (nb, NARROW), 1)

    def logsumexp(mask8):
        masked = jnp.where(mask8, narrow, -1e30)
        m = jnp.max(masked, axis=-1, keepdims=True)
        # exp only of masked (bounded) values -> no overflow for padded cols.
        s = jnp.sum(jnp.where(mask8, jnp.exp(masked - m), 0.0),
                    axis=-1, keepdims=True)
        return m + jnp.log(s)                                     # [NB, 1]

    lse_task = logsumexp(col8 < num_task)
    lse_dom = logsumexp((col8 >= num_task) & (col8 < num_task + num_dom))

    col = jax.lax.broadcasted_iota(jnp.int32, logits.shape, 1)
    task_mask = col < num_task
    dom_mask = (col >= num_task) & (col < num_task + num_dom)
    out_ref[...] = jnp.where(task_mask, logits - lse_task,
                             jnp.where(dom_mask, logits - lse_dom, 0.0))


def _run_fused(params, inputs_list):
    """list of [B,2,S] int32 -> [NB_pad, 128] log-prob slab (ONE pallas_call)."""
    x = jnp.concatenate(inputs_list, axis=0)                    # [NB, 2, S]
    ids = x[:, 0].astype(jnp.int32)                             # [NB, S]
    mask = x[:, 1].astype(jnp.float32)                          # [NB, S]
    nb = ids.shape[0]
    nb_pad = _round_up(nb, 8)                                   # full-sublane slab
    pad = nb_pad - nb
    ids = jnp.pad(ids, ((0, pad), (0, 0)))
    mask = jnp.pad(mask, ((0, pad), (0, 0)))

    denom = jnp.maximum(jnp.sum(mask, axis=1, keepdims=True), 1.0)
    pool_w = mask / denom                                       # [NB_pad, S]
    ids_flat = ids.reshape(-1, 1)                               # [NB_pad*S, 1]

    kernel = functools.partial(_mdan_fused_kernel,
                               seq_len=S, num_task=C, num_dom=D)
    return pl.pallas_call(
        kernel,
        out_shape=jax.ShapeDtypeStruct((nb_pad, LANE), jnp.float32),
        in_specs=[_VMEM_SPEC] * 9,
        out_specs=_VMEM_SPEC,
    )(ids_flat, pool_w, params["embedding"], params["w_enc"], params["b_enc"],
      params["w_fe"], params["b_fe"], params["w_cls"], params["b_cls"])


# ---------------- ReverseLayerF: identity fwd, -alpha * grad bwd ----------------
@jax.custom_vjp
def reverse_layer(x, alpha):
    return x

def _rev_fwd(x, alpha):
    return x, alpha

def _rev_bwd(alpha, g):
    return (-g * alpha, None)

reverse_layer.defvjp(_rev_fwd, _rev_bwd)


# ---------------- parameter init (deterministic, bf16 weight storage) ----------------
def init_params():
    k = jax.random.PRNGKey(42)
    keys = jax.random.split(k, 6)
    scale = 0.1

    emb = scale * jax.random.normal(keys[0], (V, H), jnp.float32)
    emb_pad = jnp.zeros((VP, H), jnp.float32).at[:V].set(emb)

    w_tc = scale * jax.random.normal(keys[3], (F, C), jnp.float32)
    b_tc = jnp.zeros((1, C), jnp.float32)
    # shared domain classifier (nn.ModuleList reuses the SAME instance)
    w_dc = scale * jax.random.normal(keys[4], (F, D), jnp.float32)
    b_dc = jnp.zeros((1, D), jnp.float32)

    # lane-dense fused classifier: cols [0,C)=task, [C,C+D)=domain, rest zero.
    w_cls = jnp.zeros((F, LANE), jnp.float32)
    w_cls = w_cls.at[:, :C].set(w_tc).at[:, C:C + D].set(w_dc)
    b_cls = jnp.zeros((1, LANE), jnp.float32)
    b_cls = b_cls.at[:, :C].set(b_tc).at[:, C:C + D].set(b_dc)   # keep real biases

    return {
        # bf16 at rest: half the HBM->VMEM bytes, no per-call casts in-kernel.
        "embedding": emb_pad.astype(jnp.bfloat16),
        "w_enc": (scale * jax.random.normal(keys[1], (H, H), jnp.float32)
                  ).astype(jnp.bfloat16),
        "b_enc": jnp.zeros((1, H), jnp.float32),
        "w_fe": (scale * jax.random.normal(keys[2], (H, F), jnp.float32)
                 ).astype(jnp.bfloat16),
        "b_fe": jnp.zeros((1, F), jnp.float32),
        "w_cls": w_cls.astype(jnp.bfloat16),
        "b_cls": b_cls,
    }


# ---------------- MDAN forward / inference (jit-ed end to end) ----------------
@jax.jit
def _mdan_forward_jit(params, src_input_list, tgt_input_data):
    n_src = len(src_input_list)                                  # static (pytree)
    out = _run_fused(params, list(src_input_list) + [tgt_input_data])

    task_lp = out[:, :C]                                         # [NB_pad, C]
    dom_lp = out[:, C:C + D]                                     # [NB_pad, D]

    logprobs = [task_lp[i * B:(i + 1) * B] for i in range(n_src)]
    # ReverseLayerF is identity in the forward pass (alpha only affects grads).
    sdomains = [dom_lp[i * B:(i + 1) * B] for i in range(n_src)]
    t_dom = dom_lp[n_src * B:(n_src + 1) * B]                    # computed once,
    tdomains = [t_dom for _ in range(n_src)]                     # shared classifier
    return logprobs, sdomains, tdomains


@jax.jit
def _mdan_inference_jit(params, input_data):
    out = _run_fused(params, [input_data])
    return out[:input_data.shape[0], :C]


def mdan_forward(params, src_input_data, tgt_input_data, alpha=1.0):
    """Mirrors MDAN_model.forward: returns (logprobs, sdomains, tdomains)."""
    del alpha  # identity in forward; only affects gradients (reverse_layer).
    return _mdan_forward_jit(params, list(src_input_data), tgt_input_data)


def mdan_inference(params, input_data):
    return _mdan_inference_jit(params, input_data)


# ---------------- main ----------------
if __name__ == "__main__":
    params = init_params()

    key = jax.random.PRNGKey(0)
    k_ids, _ = jax.random.split(key)

    def make_input(subkey):
        ids = jax.random.randint(subkey, (B, S), 0, V, dtype=jnp.int32)
        # attention mask: first few positions valid, rest padded
        pos = jnp.arange(S)[None, :]
        valid_len = jnp.array([[S], [S - 2]], dtype=jnp.int32)   # at least 1 valid
        mask = (pos < valid_len).astype(jnp.int32)
        return jnp.stack([ids, mask], axis=1)                    # [B, 2, S]

    src_keys = jax.random.split(k_ids, NUM_SRC_DOMAINS + 1)
    src_input_data = [make_input(src_keys[i]) for i in range(NUM_SRC_DOMAINS)]
    tgt_input_data = make_input(src_keys[-1])

    logprobs, sdomains, tdomains = mdan_forward(
        params, src_input_data, tgt_input_data, alpha=1.0)
    infer_out = mdan_inference(params, tgt_input_data)

    for out in logprobs + sdomains + tdomains + [infer_out]:
        jax.block_until_ready(out)

    # sanity checks: shapes and log_softmax rows sum to 1 in prob space
    assert len(logprobs) == NUM_SRC_DOMAINS
    assert logprobs[0].shape == (B, C)
    assert sdomains[0].shape == (B, D) and tdomains[0].shape == (B, D)
    assert infer_out.shape == (B, C)
    assert jnp.allclose(jnp.exp(logprobs[0]).sum(-1), 1.0, atol=1e-4)
    assert jnp.allclose(jnp.exp(sdomains[0]).sum(-1), 1.0, atol=1e-4)
    assert jnp.allclose(jnp.exp(tdomains[0]).sum(-1), 1.0, atol=1e-4)
    assert jnp.allclose(jnp.exp(infer_out).sum(-1), 1.0, atol=1e-4)

    print("KERNEL_OK")
</pallas_src>

<mosaic_0001>
module attributes {stable_mosaic.version = 11 : i64} {
  func.func @_mdan_fused_kernel(%arg0: memref<64x1xi32, #tpu.memory_space<vmem>>, %arg1: memref<8x8xf32, #tpu.memory_space<vmem>>, %arg2: memref<64x32xbf16, #tpu.memory_space<vmem>>, %arg3: memref<32x32xbf16, #tpu.memory_space<vmem>>, %arg4: memref<1x32xf32, #tpu.memory_space<vmem>>, %arg5: memref<32x32xbf16, #tpu.memory_space<vmem>>, %arg6: memref<1x32xf32, #tpu.memory_space<vmem>>, %arg7: memref<32x128xbf16, #tpu.memory_space<vmem>>, %arg8: memref<1x128xf32, #tpu.memory_space<vmem>>, %arg9: memref<8x128xf32, #tpu.memory_space<vmem>>) attributes {dimension_semantics = [], scalar_prefetch = 0 : i64, scratch_operands = 0 : i64, tpu.core_type = #tpu.core_type<tc>} {
    %0 = tpu.iota {dimensions = array<i32: 1>} : vector<64x64xi32>
    %c0 = arith.constant 0 : index
    %c0_0 = arith.constant 0 : index
    %1 = vector.load %arg0[%c0, %c0_0] : memref<64x1xi32, #tpu.memory_space<vmem>>, vector<64x1xi32>
    %2 = vector.broadcast %1 : vector<64x1xi32> to vector<64x64xi32>
    %3 = arith.cmpi eq, %0, %2 : vector<64x64xi32>
    %4 = arith.extui %3 : vector<64x64xi1> to vector<64x64xi32>
    %5 = arith.sitofp %4 : vector<64x64xi32> to vector<64x64xf32>
    %6 = arith.truncf %5 : vector<64x64xf32> to vector<64x64xbf16>
    %c0_1 = arith.constant 0 : index
    %c0_2 = arith.constant 0 : index
    %7 = vector.load %arg2[%c0_1, %c0_2] : memref<64x32xbf16, #tpu.memory_space<vmem>>, vector<64x32xbf16>
    %cst = arith.constant dense<0.000000e+00> : vector<64x32xf32>
    %8 = tpu.matmul %6, %7, %cst {dimension_numbers = #tpu.dot_dimension_numbers<[1], [0], [0], [1], [0, 0, 1, 1], [], []>} : vector<64x64xbf16>, vector<64x32xbf16>, vector<64x32xf32> -> vector<64x32xf32>
    %9 = arith.truncf %8 : vector<64x32xf32> to vector<64x32xbf16>
    %c0_3 = arith.constant 0 : index
    %c0_4 = arith.constant 0 : index
    %10 = vector.load %arg3[%c0_3, %c0_4] : memref<32x32xbf16, #tpu.memory_space<vmem>>, vector<32x32xbf16>
    %cst_5 = arith.constant dense<0.000000e+00> : vector<64x32xf32>
    %11 = tpu.matmul %9, %10, %cst_5 {dimension_numbers = #tpu.dot_dimension_numbers<[1], [0], [0], [1], [0, 0, 1, 1], [], []>} : vector<64x32xbf16>, vector<32x32xbf16>, vector<64x32xf32> -> vector<64x32xf32>
    %c0_6 = arith.constant 0 : index
    %c0_7 = arith.constant 0 : index
    %12 = vector.load %arg4[%c0_6, %c0_7] : memref<1x32xf32, #tpu.memory_space<vmem>>, vector<1x32xf32>
    %13 = vector.broadcast %12 : vector<1x32xf32> to vector<64x32xf32>
    %14 = arith.addf %11, %13 : vector<64x32xf32>
    %15 = math.tanh %14 : vector<64x32xf32>
    %16 = vector.shape_cast %15 : vector<64x32xf32> to vector<8x8x32xf32>
    %c0_8 = arith.constant 0 : index
    %c0_9 = arith.constant 0 : index
    %17 = vector.load %arg1[%c0_8, %c0_9] : memref<8x8xf32, #tpu.memory_space<vmem>>, vector<8x8xf32>
    %18 = vector.shape_cast %17 : vector<8x8xf32> to vector<8x8x1xf32>
    %19 = vector.broadcast %18 : vector<8x8x1xf32> to vector<8x8x32xf32>
    %20 = arith.mulf %19, %16 : vector<8x8x32xf32>
    %cst_10 = arith.constant dense<0.000000e+00> : vector<8x32xf32>
    %21 = vector.multi_reduction <add>, %20, %cst_10 [1] : vector<8x8x32xf32> to vector<8x32xf32>
    %22 = arith.truncf %21 : vector<8x32xf32> to vector<8x32xbf16>
    %c0_11 = arith.constant 0 : index
    %c0_12 = arith.constant 0 : index
    %23 = vector.load %arg5[%c0_11, %c0_12] : memref<32x32xbf16, #tpu.memory_space<vmem>>, vector<32x32xbf16>
    %cst_13 = arith.constant dense<0.000000e+00> : vector<8x32xf32>
    %24 = tpu.matmul %22, %23, %cst_13 {dimension_numbers = #tpu.dot_dimension_numbers<[1], [0], [0], [1], [0, 0, 1, 1], [], []>} : vector<8x32xbf16>, vector<32x32xbf16>, vector<8x32xf32> -> vector<8x32xf32>
    %c0_14 = arith.constant 0 : index
    %c0_15 = arith.constant 0 : index
    %25 = vector.load %arg6[%c0_14, %c0_15] : memref<1x32xf32, #tpu.memory_space<vmem>>, vector<1x32xf32>
    %26 = vector.broadcast %25 : vector<1x32xf32> to vector<8x32xf32>
    %27 = arith.addf %24, %26 : vector<8x32xf32>
    %cst_16 = arith.constant 0.000000e+00 : f32
    %28 = vector.broadcast %cst_16 : f32 to vector<8x32xf32>
    %29 = arith.maximumf %27, %28 : vector<8x32xf32>
    %30 = arith.truncf %29 : vector<8x32xf32> to vector<8x32xbf16>
    %c0_17 = arith.constant 0 : index
    %c0_18 = arith.constant 0 : index
    %31 = vector.load %arg7[%c0_17, %c0_18] : memref<32x128xbf16, #tpu.memory_space<vmem>>, vector<32x128xbf16>
    %cst_19 = arith.constant dense<0.000000e+00> : vector<8x128xf32>
    %32 = tpu.matmul %30, %31, %cst_19 {dimension_numbers = #tpu.dot_dimension_numbers<[1], [0], [0], [1], [0, 0, 1, 1], [], []>} : vector<8x32xbf16>, vector<32x128xbf16>, vector<8x128xf32> -> vector<8x128xf32>
    %c0_20 = arith.constant 0 : index
    %c0_21 = arith.constant 0 : index
    %33 = vector.load %arg8[%c0_20, %c0_21] : memref<1x128xf32, #tpu.memory_space<vmem>>, vector<1x128xf32>
    %34 = vector.broadcast %33 : vector<1x128xf32> to vector<8x128xf32>
    %35 = arith.addf %32, %34 : vector<8x128xf32>
    %36 = vector.extract_strided_slice %35 {offsets = [0, 0], sizes = [8, 8], strides = [1, 1]} : vector<8x128xf32> to vector<8x8xf32>
    %37 = tpu.iota {dimensions = array<i32: 1>} : vector<8x8xi32>
    %c4_i32 = arith.constant 4 : i32
    %38 = vector.broadcast %c4_i32 : i32 to vector<8x8xi32>
    %39 = arith.cmpi slt, %37, %38 : vector<8x8xi32>
    %cst_22 = arith.constant -1.000000e+30 : f32
    %40 = vector.broadcast %cst_22 : f32 to vector<8x8xf32>
    %41 = arith.select %39, %36, %40 : vector<8x8xi1>, vector<8x8xf32>
    %cst_23 = arith.constant dense<0xFF800000> : vector<8xf32>
    %42 = vector.multi_reduction <maximumf>, %41, %cst_23 [1] : vector<8x8xf32> to vector<8xf32>
    %43 = vector.shape_cast %42 : vector<8xf32> to vector<8x1xf32>
    %44 = vector.broadcast %43 : vector<8x1xf32> to vector<8x8xf32>
    %45 = arith.subf %41, %44 : vector<8x8xf32>
    %46 = math.exp %45 : vector<8x8xf32>
    %cst_24 = arith.constant 0.000000e+00 : f32
    %47 = vector.broadcast %cst_24 : f32 to vector<8x8xf32>
    %48 = arith.select %39, %46, %47 : vector<8x8xi1>, vector<8x8xf32>
    %cst_25 = arith.constant dense<0.000000e+00> : vector<8xf32>
    %49 = vector.multi_reduction <add>, %48, %cst_25 [1] : vector<8x8xf32> to vector<8xf32>
    %50 = vector.shape_cast %49 : vector<8xf32> to vector<8x1xf32>
    %51 = math.log %50 : vector<8x1xf32>
    %52 = arith.addf %43, %51 : vector<8x1xf32>
    %c4_i32_26 = arith.constant 4 : i32
    %53 = vector.broadcast %c4_i32_26 : i32 to vector<8x8xi32>
    %54 = arith.cmpi sge, %37, %53 : vector<8x8xi32>
    %c6_i32 = arith.constant 6 : i32
    %55 = vector.broadcast %c6_i32 : i32 to vector<8x8xi32>
    %56 = arith.cmpi slt, %37, %55 : vector<8x8xi32>
    %57 = arith.andi %54, %56 : vector<8x8xi1>
    %cst_27 = arith.constant -1.000000e+30 : f32
    %58 = vector.broadcast %cst_27 : f32 to vector<8x8xf32>
    %59 = arith.select %57, %36, %58 : vector<8x8xi1>, vector<8x8xf32>
    %cst_28 = arith.constant dense<0xFF800000> : vector<8xf32>
    %60 = vector.multi_reduction <maximumf>, %59, %cst_28 [1] : vector<8x8xf32> to vector<8xf32>
    %61 = vector.shape_cast %60 : vector<8xf32> to vector<8x1xf32>
    %62 = vector.broadcast %61 : vector<8x1xf32> to vector<8x8xf32>
    %63 = arith.subf %59, %62 : vector<8x8xf32>
    %64 = math.exp %63 : vector<8x8xf32>
    %cst_29 = arith.constant 0.000000e+00 : f32
    %65 = vector.broadcast %cst_29 : f32 to vector<8x8xf32>
    %66 = arith.select %57, %64, %65 : vector<8x8xi1>, vector<8x8xf32>
    %cst_30 = arith.constant dense<0.000000e+00> : vector<8xf32>
    %67 = vector.multi_reduction <add>, %66, %cst_30 [1] : vector<8x8xf32> to vector<8xf32>
    %68 = vector.shape_cast %67 : vector<8xf32> to vector<8x1xf32>
    %69 = math.log %68 : vector<8x1xf32>
    %70 = arith.addf %61, %69 : vector<8x1xf32>
    %71 = tpu.iota {dimensions = array<i32: 1>} : vector<8x128xi32>
    %c4_i32_31 = arith.constant 4 : i32
    %72 = vector.broadcast %c4_i32_31 : i32 to vector<8x128xi32>
    %73 = arith.cmpi slt, %71, %72 : vector<8x128xi32>
    %c4_i32_32 = arith.constant 4 : i32
    %74 = vector.broadcast %c4_i32_32 : i32 to vector<8x128xi32>
    %75 = arith.cmpi sge, %71, %74 : vector<8x128xi32>
    %c6_i32_33 = arith.constant 6 : i32
    %76 = vector.broadcast %c6_i32_33 : i32 to vector<8x128xi32>
    %77 = arith.cmpi slt, %71, %76 : vector<8x128xi32>
    %78 = arith.andi %75, %77 : vector<8x128xi1>
    %79 = vector.broadcast %52 : vector<8x1xf32> to vector<8x128xf32>
    %80 = arith.subf %35, %79 : vector<8x128xf32>
    %81 = vector.broadcast %70 : vector<8x1xf32> to vector<8x128xf32>
    %82 = arith.subf %35, %81 : vector<8x128xf32>
    %cst_34 = arith.constant 0.000000e+00 : f32
    %83 = vector.broadcast %cst_34 : f32 to vector<8x128xf32>
    %84 = arith.select %78, %82, %83 : vector<8x128xi1>, vector<8x128xf32>
    %85 = arith.select %73, %80, %84 : vector<8x128xi1>, vector<8x128xf32>
    %c0_35 = arith.constant 0 : index
    %c0_36 = arith.constant 0 : index
    %86 = vector.load %arg9[%c0_35, %c0_36] : memref<8x128xf32, #tpu.memory_space<vmem>>, vector<8x128xf32>
    tpu.vector_store %arg9[%c0_35, %c0_36], %85 {strides = array<i32>} : memref<8x128xf32, #tpu.memory_space<vmem>>, vector<8x128xf32>,
    return
  }
}

</mosaic_0001>

<llo_original>
// kernel: _mdan_forward_jit.1
$region0: #{_mdan_forward_jit.1}
  #allocation0 [shape = 'u32[]', space=smem, size = 0x4, offset = 0x4, fixed_abs, tag = 'smem constant byte address 0x4 - core index']
  #allocation1 [shape = 'u32[72,128]{1,0:T(1,128)}', space=vmem, size = 0x9000, scoped, tag = 'internal scratch']
  %s0 = inlined_call_operand.vmem [shape: s32[64,1], index: 0, kind: input, shape index: {}]
  %s1 = inlined_call_operand.vmem [shape: f32[8,8], index: 1, kind: input, shape index: {}]
  %s2 = inlined_call_operand.vmem [shape: bf16[64,32], index: 2, kind: input, shape index: {}]
  %s3 = inlined_call_operand.vmem [shape: bf16[32,32], index: 3, kind: input, shape index: {}]
  %s4 = inlined_call_operand.vmem [shape: f32[1,32], index: 4, kind: input, shape index: {}]
  %s5 = inlined_call_operand.vmem [shape: bf16[32,32], index: 5, kind: input, shape index: {}]
  %s6 = inlined_call_operand.vmem [shape: f32[1,32], index: 6, kind: input, shape index: {}]
  %s7 = inlined_call_operand.vmem [shape: bf16[32,128], index: 7, kind: input, shape index: {}]
  %s8 = inlined_call_operand.vmem [shape: f32[1,128], index: 8, kind: input, shape index: {}]
  %s9 = inlined_call_operand.vmem [shape: f32[8,128], index: 9, kind: output, shape index: {}]
  %s10 = sld [smem:[#allocation0]]
  $region46: #{_mdan_forward_jit.1} parent=0
    _
  %s12 = ssub.s32 1, %s10
  %s13 = scalar_select 0, %s12, %s10
  // Predicated region
  $region2: #{_mdan_forward_jit.1} parent=0 // pred_check
    _
  $region3: #{_mdan_forward_jit.1} parent=0 // pred_check_branch
    %15 = sbr.rel (0) target = $region5
  $region4: #{_mdan_forward_jit.1} parent=0 // pred_region
    _
  $region5: #{_mdan_forward_jit.1} parent=0 // pred_fallthru
    _
  // Predicated region
  $region6: #{_mdan_forward_jit.1} parent=0 // pred_check
    _
  $region7: #{_mdan_forward_jit.1} parent=0 // pred_check_branch
    %17 = sbr.rel (0) target = $region9
  $region8: #{_mdan_forward_jit.1} parent=0 // pred_region
    _
  $region9: #{_mdan_forward_jit.1} parent=0 // pred_fallthru
    _
  // Predicated region
  $region10: #{_mdan_forward_jit.1} parent=0 // pred_check
    _
  $region11: #{_mdan_forward_jit.1} parent=0 // pred_check_branch
    %19 = sbr.rel (0) target = $region13
  $region12: #{_mdan_forward_jit.1} parent=0 // pred_region
    _
  $region13: #{_mdan_forward_jit.1} parent=0 // pred_fallthru
    _
  // Predicated region
  $region14: #{_mdan_forward_jit.1} parent=0 // pred_check
    _
  $region15: #{_mdan_forward_jit.1} parent=0 // pred_check_branch
    %21 = sbr.rel (0) target = $region17
  $region16: #{_mdan_forward_jit.1} parent=0 // pred_region
    _
  $region17: #{_mdan_forward_jit.1} parent=0 // pred_fallthru
    _
  // Predicated region
  $region18: #{_mdan_forward_jit.1} parent=0 // pred_check
    _
  $region19: #{_mdan_forward_jit.1} parent=0 // pred_check_branch
    %23 = sbr.rel (0) target = $region21
  $region20: #{_mdan_forward_jit.1} parent=0 // pred_region
    _
  $region21: #{_mdan_forward_jit.1} parent=0 // pred_fallthru
    _
  // Predicated region
  $region22: #{_mdan_forward_jit.1} parent=0 // pred_check
    _
  $region23: #{_mdan_forward_jit.1} parent=0 // pred_check_branch
    %25 = sbr.rel (0) target = $region25
  $region24: #{_mdan_forward_jit.1} parent=0 // pred_region
    _
  $region25: #{_mdan_forward_jit.1} parent=0 // pred_fallthru
    _
  // Predicated region
  $region26: #{_mdan_forward_jit.1} parent=0 // pred_check
    _
  $region27: #{_mdan_forward_jit.1} parent=0 // pred_check_branch
    %27 = sbr.rel (0) target = $region29
  $region28: #{_mdan_forward_jit.1} parent=0 // pred_region
    _
  $region29: #{_mdan_forward_jit.1} parent=0 // pred_fallthru
    _
  // Predicated region
  $region30: #{_mdan_forward_jit.1} parent=0 // pred_check
    _
  $region31: #{_mdan_forward_jit.1} parent=0 // pred_check_branch
    %29 = sbr.rel (0) target = $region33
  $region32: #{_mdan_forward_jit.1} parent=0 // pred_region
    _
  $region33: #{_mdan_forward_jit.1} parent=0 // pred_fallthru
    _
  // Predicated region
  $region34: #{_mdan_forward_jit.1} parent=0 // pred_check
    _
  $region35: #{_mdan_forward_jit.1} parent=0 // pred_check_branch
    %31 = sbr.rel (0) target = $region37
  $region36: #{_mdan_forward_jit.1} parent=0 // pred_region
    _
  $region37: #{_mdan_forward_jit.1} parent=0 // pred_fallthru
    _
  %v33 = vlaneseq
  %v34 = vand.u32 %v33, 127
  %v35 = vld [vmem:[%s0] sm:$0xff]
  %v36 = vld [vmem:[%s0 + $0x8] sm:$0xff]
  %v37 = vld [vmem:[%s0 + $0x10] sm:$0xff]
  %v38 = vld [vmem:[%s0 + $0x18] sm:$0xff]
  %v39 = vld [vmem:[%s0 + $0x20] sm:$0xff]
  %v40 = vld [vmem:[%s0 + $0x28] sm:$0xff]
  %v41 = vld [vmem:[%s0 + $0x30] sm:$0xff]
  %v42 = vld [vmem:[%s0 + $0x38] sm:$0xff]
  %43 = vset.pattern.permute.xlu0 0
  %44 = vperm.xlu0 %43, %v35
  %v45 = vpop.permute.xlu0 %44
  %46 = vset.pattern.permute.xlu0 0
  %47 = vperm.xlu0 %46, %v36
  %v48 = vpop.permute.xlu0 %47
  %49 = vset.pattern.permute.xlu0 0
  %50 = vperm.xlu0 %49, %v37
  %v51 = vpop.permute.xlu0 %50
  %52 = vset.pattern.permute.xlu0 0
  %53 = vperm.xlu0 %52, %v38
  %v54 = vpop.permute.xlu0 %53
  %55 = vset.pattern.permute.xlu0 0
  %56 = vperm.xlu0 %55, %v39
  %v57 = vpop.permute.xlu0 %56
  %58 = vset.pattern.permute.xlu0 0
  %59 = vperm.xlu0 %58, %v40
  %v60 = vpop.permute.xlu0 %59
  %61 = vset.pattern.permute.xlu0 0
  %62 = vperm.xlu0 %61, %v41
  %v63 = vpop.permute.xlu0 %62
  %64 = vset.pattern.permute.xlu0 0
  %65 = vperm.xlu0 %64, %v42
  %v66 = vpop.permute.xlu0 %65
  %vm67 = vcmp.eq.s32.totalorder %v34, %v45
  %vm68 = vcmp.eq.s32.totalorder %v34, %v48
  %vm69 = vcmp.eq.s32.totalorder %v34, %v51
  %vm70 = vcmp.eq.s32.totalorder %v34, %v54
  %vm71 = vcmp.eq.s32.totalorder %v34, %v57
  %vm72 = vcmp.eq.s32.totalorder %v34, %v60
  %vm73 = vcmp.eq.s32.totalorder %v34, %v63
  %vm74 = vcmp.eq.s32.totalorder %v34, %v66
  %v75 = vsel %vm67, 1, 0
  %v76 = vsel %vm68, 1, 0
  %v77 = vsel %vm69, 1, 0
  %v78 = vsel %vm70, 1, 0
  %v79 = vsel %vm71, 1, 0
  %v80 = vsel %vm72, 1, 0
  %v81 = vsel %vm73, 1, 0
  %v82 = vsel %vm74, 1, 0
  %v83 = vcvt.s32.f32 %v75
  %v84 = vcvt.s32.f32 %v76
  %v85 = vcvt.s32.f32 %v77
  %v86 = vcvt.s32.f32 %v78
  %v87 = vcvt.s32.f32 %v79
  %v88 = vcvt.s32.f32 %v80
  %v89 = vcvt.s32.f32 %v81
  %v90 = vcvt.s32.f32 %v82
  %v91 = vpack.c.bf16 %v84, %v83
  %v92 = vpack.c.bf16 %v86, %v85
  %v93 = vpack.c.bf16 %v88, %v87
  %v94 = vpack.c.bf16 %v90, %v89
  %v95 = vld [vmem:[%s2] sm:$0xf]
  %v96 = vld [vmem:[%s2 + $0x4] sm:$0xf]
  %v97 = vld [vmem:[%s2 + $0x8] sm:$0xf]
  %v98 = vld [vmem:[%s2 + $0xc] sm:$0xf]
  %v99 = vld [vmem:[%s2 + $0x10] sm:$0xf]
  %v100 = vld [vmem:[%s2 + $0x14] sm:$0xf]
  %v101 = vld [vmem:[%s2 + $0x18] sm:$0xf]
  %v102 = vld [vmem:[%s2 + $0x1c] sm:$0xf]
  %v111 = vunpack.c.l.b16 %v95
  %v112 = vunpack.c.l.b16 %v96
  %v113 = vunpack.c.l.b16 %v97
  %v114 = vunpack.c.l.b16 %v98
  %v115 = vunpack.c.l.b16 %v99
  %v116 = vunpack.c.l.b16 %v100
  %v117 = vunpack.c.l.b16 %v101
  %v118 = vunpack.c.l.b16 %v102
  %v119 = vpack.c.b16 %v112, %v111
  %v120 = vpack.c.b16 %v114, %v113
  %v121 = vpack.c.b16 %v116, %v115
  %v122 = vpack.c.b16 %v118, %v117
  %vm127 = vcmask 523264
  %v129 = vsel %vm127, %v91, 0
  %v132 = vsel %vm127, %v92, 0
  %v135 = vsel %vm127, %v93, 0
  %v138 = vsel %vm127, %v94, 0
  %140 = vmatpush.bf16.msra.mxu0 0
  %141 = vmatpush.bf16.msra.mxu0 0
  %142 = vmatpush.bf16.msra.mxu0 0
  %143 = vmatpush.bf16.msra.mxu0 0
  %144 = vmatpush.bf16.msra.mxu0 %v122
  %145 = vmatpush.bf16.msra.mxu0 %v121
  %146 = vmatpush.bf16.msra.mxu0 %v120
  %147 = vmatpush.bf16.msra.mxu0 %v119
  %148 = vmatmul.bf16.gmra.mxu0 %v129
  %v149 = vpop.f32.mrf.mxu0
  %v150 = vadd.f32 0.0, %v149
  %v151 = vpop.f32.mrf.mxu0
  %v152 = vadd.f32 0.0, %v151
  %153 = vmatmul.bf16.gmra.mxu0 %v132
  %v154 = vpop.f32.mrf.mxu0
  %v155 = vadd.f32 0.0, %v154
  %v156 = vpop.f32.mrf.mxu0
  %v157 = vadd.f32 0.0, %v156
  %158 = vmatmul.bf16.gmra.mxu0 %v135
  %v159 = vpop.f32.mrf.mxu0
  %v160 = vadd.f32 0.0, %v159
  %v161 = vpop.f32.mrf.mxu0
  %v162 = vadd.f32 0.0, %v161
  %163 = vmatmul.bf16.gmra.mxu0 %v138
  %v164 = vpop.f32.mrf.mxu0
  %v165 = vadd.f32 0.0, %v164
  %v166 = vpop.f32.mrf.mxu0
  %v167 = vadd.f32 0.0, %v166
  %168 = vdwg.mxu0
  %v169 = vpack.c.bf16 %v152, %v150
  %v170 = vpack.c.bf16 %v157, %v155
  %v171 = vpack.c.bf16 %v162, %v160
  %v172 = vpack.c.bf16 %v167, %v165
  %v173 = vld [vmem:[%s3] sm:$0xf]
  %v174 = vld [vmem:[%s3 + $0x4] sm:$0xf]
  %v175 = vld [vmem:[%s3 + $0x8] sm:$0xf]
  %v176 = vld [vmem:[%s3 + $0xc] sm:$0xf]
  %v177 = vld [vmem:[%s4] sm:$0x1]
  %v179 = vperm.slane %v177, 0
  %v185 = vunpack.c.l.b16 %v173
  %v186 = vunpack.c.l.b16 %v174
  %v187 = vunpack.c.l.b16 %v175
  %v188 = vunpack.c.l.b16 %v176
  %v189 = vpack.c.b16 %v186, %v185
  %v190 = vpack.c.b16 %v188, %v187
  %vm193 = vcmask 261120
  %v195 = vsel %vm193, %v169, 0
  %v198 = vsel %vm193, %v170, 0
  %v201 = vsel %vm193, %v171, 0
  %v204 = vsel %vm193, %v172, 0
  %206 = vmatpush.bf16.msra.mxu0 0
  %207 = vmatpush.bf16.msra.mxu0 0
  %208 = vmatpush.bf16.msra.mxu0 0
  %209 = vmatpush.bf16.msra.mxu0 0
  %210 = vmatpush.bf16.msra.mxu0 0
  %211 = vmatpush.bf16.msra.mxu0 0
  %212 = vmatpush.bf16.msra.mxu0 %v190
  %213 = vmatpush.bf16.msra.mxu0 %v189
  %214 = vmatmul.bf16.gmra.mxu0 %v195
  %v215 = vpop.f32.mrf.mxu0
  %v216 = vadd.f32 %v179, %v215
  %v217 = vpop.f32.mrf.mxu0
  %v218 = vadd.f32 %v179, %v217
  %219 = vmatmul.bf16.gmra.mxu0 %v198
  %v220 = vpop.f32.mrf.mxu0
  %v221 = vadd.f32 %v179, %v220
  %v222 = vpop.f32.mrf.mxu0
  %v223 = vadd.f32 %v179, %v222
  %224 = vmatmul.bf16.gmra.mxu0 %v201
  %v225 = vpop.f32.mrf.mxu0
  %v226 = vadd.f32 %v179, %v225
  %v227 = vpop.f32.mrf.mxu0
  %v228 = vadd.f32 %v179, %v227
  %229 = vmatmul.bf16.gmra.mxu0 %v204
  %v230 = vpop.f32.mrf.mxu0
  %v231 = vadd.f32 %v179, %v230
  %v232 = vpop.f32.mrf.mxu0
  %v233 = vadd.f32 %v179, %v232
  %234 = vdwg.mxu0
  %v235 = vtanh.pop %v216
  %v236 = vtanh.pop %v218
  %v237 = vtanh.pop %v221
  %v238 = vtanh.pop %v223
  %v239 = vtanh.pop %v226
  %v240 = vtanh.pop %v228
  %v241 = vtanh.pop %v231
  %v242 = vtanh.pop %v233
  %v243 = vld [vmem:[%s1] sm:$0xff]
  %v244 = vperm.slane %v243, 0
  %v245 = vlaneseq
  %v246 = vshrl.u32 %v245, 7
  %248 = vset.pattern.permute.xlu0 %v246
  %249 = vperm.xlu0 %248, %v244
  %v250 = vpop.permute.xlu0 %249
  %v251 = vperm.slane %v243, 1
  %v252 = vlaneseq
  %v253 = vshrl.u32 %v252, 7
  %255 = vset.pattern.permute.xlu0 %v253
  %256 = vperm.xlu0 %255, %v251
  %v257 = vpop.permute.xlu0 %256
  %v258 = vperm.slane %v243, 2
  %v259 = vlaneseq
  %v260 = vshrl.u32 %v259, 7
  %262 = vset.pattern.permute.xlu0 %v260
  %263 = vperm.xlu0 %262, %v258
  %v264 = vpop.permute.xlu0 %263
  %v265 = vperm.slane %v243, 3
  %v266 = vlaneseq
  %v267 = vshrl.u32 %v266, 7
  %269 = vset.pattern.permute.xlu0 %v267
  %270 = vperm.xlu0 %269, %v265
  %v271 = vpop.permute.xlu0 %270
  %v272 = vperm.slane %v243, 4
  %v273 = vlaneseq
  %v274 = vshrl.u32 %v273, 7
  %276 = vset.pattern.permute.xlu0 %v274
  %277 = vperm.xlu0 %276, %v272
  %v278 = vpop.permute.xlu0 %277
  %v279 = vperm.slane %v243, 5
  %v280 = vlaneseq
  %v281 = vshrl.u32 %v280, 7
  %283 = vset.pattern.permute.xlu0 %v281
  %284 = vperm.xlu0 %283, %v279
  %v285 = vpop.permute.xlu0 %284
  %v286 = vperm.slane %v243, 6
  %v287 = vlaneseq
  %v288 = vshrl.u32 %v287, 7
  %290 = vset.pattern.permute.xlu0 %v288
  %291 = vperm.xlu0 %290, %v286
  %v292 = vpop.permute.xlu0 %291
  %v293 = vperm.slane %v243, 7
  %v294 = vlaneseq
  %v295 = vshrl.u32 %v294, 7
  %297 = vset.pattern.permute.xlu0 %v295
  %298 = vperm.xlu0 %297, %v293
  %v299 = vpop.permute.xlu0 %298
  %v300 = vmul.f32 %v250, %v235
  %v301 = vmul.f32 %v257, %v236
  %v302 = vmul.f32 %v264, %v237
  %v303 = vmul.f32 %v271, %v238
  %v304 = vmul.f32 %v278, %v239
  %v305 = vmul.f32 %v285, %v240
  %v306 = vmul.f32 %v292, %v241
  %v307 = vmul.f32 %v299, %v242
  %v308 = vsel %vm193, %v300, 0.0
  %v309 = vrot.slane %v308, 4
  %v310 = vadd.f32 %v308, %v309
  %v311 = vrot.slane %v310, 2
  %v312 = vadd.f32 %v310, %v311
  %v313 = vrot.slane %v312, 1
  %v314 = vadd.f32 %v312, %v313
  %v315 = vsel %vm193, %v301, 0.0
  %v316 = vrot.slane %v315, 4
  %v317 = vadd.f32 %v315, %v316
  %v318 = vrot.slane %v317, 2
  %v319 = vadd.f32 %v317, %v318
  %v320 = vrot.slane %v319, 1
  %v321 = vadd.f32 %v319, %v320
  %v322 = vsel %vm193, %v302, 0.0
  %v323 = vrot.slane %v322, 4
  %v324 = vadd.f32 %v322, %v323
  %v325 = vrot.slane %v324, 2
  %v326 = vadd.f32 %v324, %v325
  %v327 = vrot.slane %v326, 1
  %v328 = vadd.f32 %v326, %v327
  %v329 = vsel %vm193, %v303, 0.0
  %v330 = vrot.slane %v329, 4
  %v331 = vadd.f32 %v329, %v330
  %v332 = vrot.slane %v331, 2
  %v333 = vadd.f32 %v331, %v332
  %v334 = vrot.slane %v333, 1
  %v335 = vadd.f32 %v333, %v334
  %v336 = vsel %vm193, %v304, 0.0
  %v337 = vrot.slane %v336, 4
  %v338 = vadd.f32 %v336, %v337
  %v339 = vrot.slane %v338, 2
  %v340 = vadd.f32 %v338, %v339
  %v341 = vrot.slane %v340, 1
  %v342 = vadd.f32 %v340, %v341
  %v343 = vsel %vm193, %v305, 0.0
  %v344 = vrot.slane %v343, 4
  %v345 = vadd.f32 %v343, %v344
  %v346 = vrot.slane %v345, 2
  %v347 = vadd.f32 %v345, %v346
  %v348 = vrot.slane %v347, 1
  %v349 = vadd.f32 %v347, %v348
  %v350 = vsel %vm193, %v306, 0.0
  %v351 = vrot.slane %v350, 4
  %v352 = vadd.f32 %v350, %v351
  %v353 = vrot.slane %v352, 2
  %v354 = vadd.f32 %v352, %v353
  %v355 = vrot.slane %v354, 1
  %v356 = vadd.f32 %v354, %v355
  %v357 = vsel %vm193, %v307, 0.0
  %v358 = vrot.slane %v357, 4
  %v359 = vadd.f32 %v357, %v358
  %v360 = vrot.slane %v359, 2
  %v361 = vadd.f32 %v359, %v360
  %v362 = vrot.slane %v361, 1
  %v363 = vadd.f32 %v361, %v362
  %v364 = vpack.c.bf16 %v314, %v314
  %v365 = vpack.c.bf16 %v321, %v321
  %v366 = vpack.c.bf16 %v328, %v328
  %v367 = vpack.c.bf16 %v335, %v335
  %v368 = vpack.c.bf16 %v342, %v342
  %v369 = vpack.c.bf16 %v349, %v349
  %v370 = vpack.c.bf16 %v356, %v356
  %v371 = vpack.c.bf16 %v363, %v363
  %v372 = vld [vmem:[%s5] sm:$0xf]
  %v373 = vld [vmem:[%s5 + $0x4] sm:$0xf]
  %v374 = vld [vmem:[%s5 + $0x8] sm:$0xf]
  %v375 = vld [vmem:[%s5 + $0xc] sm:$0xf]
  %v376 = vld [vmem:[%s6] sm:$0x1]
  %v378 = vperm.slane %v376, 0
  %v388 = vunpack.c.l.b16 %v364
  %v389 = vunpack.c.l.b16 %v365
  %v390 = vunpack.c.l.b16 %v366
  %v391 = vunpack.c.l.b16 %v367
  %v392 = vunpack.c.l.b16 %v368
  %v393 = vunpack.c.l.b16 %v369
  %v394 = vunpack.c.l.b16 %v370
  %v395 = vunpack.c.l.b16 %v371
  %vm396 = vcmask 1041409
  %v397 = vsel %vm396, %v389, %v388
  %vm398 = vcmask 1042434
  %v399 = vsel %vm398, %v390, %v397
  %vm400 = vcmask 1043459
  %v401 = vsel %vm400, %v391, %v399
  %vm402 = vcmask 1044484
  %v403 = vsel %vm402, %v392, %v401
  %vm404 = vcmask 1045509
  %v405 = vsel %vm404, %v393, %v403
  %vm406 = vcmask 1046534
  %v407 = vsel %vm406, %v394, %v405
  %vm408 = vcmask 1047559
  %v409 = vsel %vm408, %v395, %v407
  %v410 = vpack.c.b16 %v409, %v409
  %v415 = vunpack.c.l.b16 %v372
  %v416 = vunpack.c.l.b16 %v373
  %v417 = vunpack.c.l.b16 %v374
  %v418 = vunpack.c.l.b16 %v375
  %v419 = vpack.c.b16 %v416, %v415
  %v420 = vpack.c.b16 %v418, %v417
  %v424 = vsel %vm193, %v410, 0
  %426 = vmatpush.bf16.msra.mxu0 0
  %427 = vmatpush.bf16.msra.mxu0 0
  %428 = vmatpush.bf16.msra.mxu0 0
  %429 = vmatpush.bf16.msra.mxu0 0
  %430 = vmatpush.bf16.msra.mxu0 0
  %431 = vmatpush.bf16.msra.mxu0 0
  %432 = vmatpush.bf16.msra.mxu0 %v420
  %433 = vmatpush.bf16.msra.mxu0 %v419
  %434 = vmatmul.bf16.gmra.mxu0 %v424
  %v435 = vpop.f32.mrf.mxu0
  %v436 = vadd.f32 %v378, %v435
  %v437 = vpop.f32.mrf.mxu0
  %438 = vdwg.mxu0
  %v439 = vmax.f32 %v436, 0.0
  %v440 = vpack.c.bf16 %v439, %v439
  %v441 = vld [vmem:[%s7] sm:$0xf]
  %v442 = vld [vmem:[%s7 + $0x4] sm:$0xf]
  %v443 = vld [vmem:[%s7 + $0x8] sm:$0xf]
  %v444 = vld [vmem:[%s7 + $0xc] sm:$0xf]
  %v445 = vld [vmem:[%s8] sm:$0x1]
  %v447 = vperm.slane %v445, 0
  %v453 = vunpack.c.l.b16 %v441
  %v454 = vunpack.c.l.b16 %v442
  %v455 = vunpack.c.l.b16 %v443
  %v456 = vunpack.c.l.b16 %v444
  %v457 = vpack.c.b16 %v454, %v453
  %v458 = vpack.c.b16 %v456, %v455
  %v462 = vsel %vm193, %v440, 0
  %464 = vmatpush.bf16.msra.mxu0 0
  %465 = vmatpush.bf16.msra.mxu0 0
  %466 = vmatpush.bf16.msra.mxu0 0
  %467 = vmatpush.bf16.msra.mxu0 0
  %468 = vmatpush.bf16.msra.mxu0 0
  %469 = vmatpush.bf16.msra.mxu0 0
  %470 = vmatpush.bf16.msra.mxu0 %v458
  %471 = vmatpush.bf16.msra.mxu0 %v457
  %472 = vmatmul.bf16.gmra.mxu0 %v462
  %v473 = vpop.f32.mrf.mxu0
  %v474 = vadd.f32 %v447, %v473
  %v475 = vpop.f32.mrf.mxu0
  %476 = vdwg.mxu0
  %vm477 = vcmp.lt.s32.totalorder %v34, 4
  %v478 = vsel %vm477, %v474, -1e+30
  %vm479 = vcmask 64512
  %v480 = vsel %vm479, %v478, -inf
  %481 = vmax.xlane.f32.xlu0 %v480
  %v482 = vpop.xlane.xlu0 %481
  %v483 = vsub.f32 %v478, %v482
  %v484 = vmul.f32 %v483, 1.442695
  %v485 = vpow.pop %v484
  %v486 = vsel %vm477, %v485, 0.0
  %v487 = vsel %vm479, %v486, 0.0
  %488 = vadd.xlane.f32.xlu0 %v487
  %v489 = vpop.xlane.xlu0 %488
  %v490 = vlog2.pop %v489
  %v491 = vmul.f32 %v490, 0.6931472
  %v492 = vadd.f32 %v482, %v491
  %vm493 = vcmp.ge.s32.totalorder %v34, 4
  %vm494 = vcmp.lt.s32.totalorder %v34, 6
  %vm495 = vmand %vm493, %vm494
  %v496 = vsel %vm495, %v474, -1e+30
  %v497 = vsel %vm479, %v496, -inf
  %498 = vmax.xlane.f32.xlu0 %v497
  %v499 = vpop.xlane.xlu0 %498
  %v500 = vsub.f32 %v496, %v499
  %v501 = vmul.f32 %v500, 1.442695
  %v502 = vpow.pop %v501
  %v503 = vsel %vm495, %v502, 0.0
  %v504 = vsel %vm479, %v503, 0.0
  %505 = vadd.xlane.f32.xlu0 %v504
  %v506 = vpop.xlane.xlu0 %505
  %v507 = vlog2.pop %v506
  %v508 = vmul.f32 %v507, 0.6931472
  %v509 = vadd.f32 %v499, %v508
  %v510 = vsub.f32 %v474, %v492
  %v511 = vsub.f32 %v474, %v509
  %v512 = vsel %vm495, %v511, 0.0
  %v513 = vsel %vm477, %v510, %v512
  %514 = vst [vmem:[%s9] sm:$0xff] %v513
  // Predicated region
  $region38: #{_mdan_forward_jit.1} parent=0 // pred_check
    _
  $region39: #{_mdan_forward_jit.1} parent=0 // pred_check_branch
    %516 = sbr.rel (0) target = $region41
  $region40: #{_mdan_forward_jit.1} parent=0 // pred_region
    _
  $region41: #{_mdan_forward_jit.1} parent=0 // pred_fallthru
    _
  // Predicated region
  $region42: #{_mdan_forward_jit.1} parent=0 // pred_check
    _
  $region43: #{_mdan_forward_jit.1} parent=0 // pred_check_branch
    %518 = sbr.rel (0) target = $region45
  $region44: #{_mdan_forward_jit.1} parent=0 // pred_region
    _
  $region45: #{_mdan_forward_jit.1} parent=0 // pred_fallthru
    _

</llo_original>
